<compile_context>
chip_gen: v7x
topology: tpu7x:2x2x1
jax: 0.10.0
libtpu: 0.0.40
codegen_flags: <defaults>
</compile_context>

<pallas_src>
import jax
import jax.numpy as jnp
from jax.experimental import pallas as pl
from jax.experimental.pallas import tpu as pltpu


def _round_up(a: int, b: int) -> int:
    return (a + b - 1) // b * b


def _ceil_div(a: int, b: int) -> int:
    return -(-a // b)


def self_att_kernel(x_ref, bias_ref, w_ref, d_ref, o_ref, proj_ref):
    # x_ref    : (1, Sp, Dp)  full (padded) sequence, compute dtype (bf16)
    # bias_ref : (1, 1, Sp)   f32 additive padding bias (0 / -inf)
    # w_ref    : (Dp, Hp)     projection weight, compute dtype (grid-invariant)
    # d_ref    : (1, Hp)      f32 diagonal scaling        (grid-invariant)
    # o_ref    : (1, tq, Dp)  f32 output query tile
    # proj_ref : (Sp, Hp)     VMEM scratch: ReLU(x @ W), computed once per batch
    qi = pl.program_id(1)
    tq = o_ref.shape[1]

    x = x_ref[0]                                              # (Sp, Dp)

    @pl.when(qi == 0)
    def _():
        p = jnp.dot(x, w_ref[...], preferred_element_type=jnp.float32)
        proj_ref[...] = jnp.maximum(p, 0.0).astype(proj_ref.dtype)

    q_start = pl.multiple_of(qi * tq, tq)
    # Fold diag(d) into the small (tq, Hp) query slice (not the full key matrix).
    q_proj = (proj_ref[pl.ds(q_start, tq), :].astype(jnp.float32)
              * d_ref[...]).astype(proj_ref.dtype)            # (tq, Hp) bf16

    # scores[q, k] = (proj[q] * d) . proj[k]   -> (tq, Sp), f32 accumulation
    scores = jax.lax.dot_general(
        q_proj, proj_ref[...], (((1,), (1,)), ((), ())),
        preferred_element_type=jnp.float32)

    # Precomputed additive padding bias + diagonal (no-self-attention) mask.
    scores = scores + bias_ref[0]                             # (1, Sp) broadcasts
    sp = scores.shape[1]
    row = jax.lax.broadcasted_iota(jnp.int32, (tq, sp), 0) + q_start
    col = jax.lax.broadcasted_iota(jnp.int32, (tq, sp), 1)
    scores = jnp.where(row == col, -jnp.inf, scores)

    # Softmax over keys (f32); normalization deferred to the (tq, Dp) output.
    m = jnp.max(scores, axis=-1, keepdims=True)
    e = jnp.exp(scores - m)                                   # <= 1, f32
    l = jnp.sum(e, axis=-1, keepdims=True)                    # (tq, 1)
    y = jnp.dot(e.astype(x.dtype), x, preferred_element_type=jnp.float32)
    o_ref[0] = (y * pl.reciprocal(l, approx=True)).astype(o_ref.dtype)


def self_att(x, mask, w, d, *, compute_dtype=jnp.bfloat16, max_tq=512):
    """x: (B, S, D) f32, mask: (B, S) with 1 = pad, w: (D, H), d: (H,)."""
    B, S, D = x.shape
    H = w.shape[1]

    # Balanced 8-aligned query tiles (avoids the 2x blowup of rounding S to tq).
    n_tiles = max(1, _ceil_div(S, max_tq))
    tq = _round_up(_ceil_div(S, n_tiles), 8)
    Sp = tq * n_tiles

    # Lane / MXU friendly feature dims.
    Dp = _round_up(D, 128)
    Hp = _round_up(H, 128)

    x_p = x.astype(jnp.float32)
    mask_p = mask.astype(jnp.int32)
    if Sp != S:
        x_p = jnp.pad(x_p, ((0, 0), (0, Sp - S), (0, 0)))
        mask_p = jnp.pad(mask_p, ((0, 0), (0, Sp - S)), constant_values=1)
    if Dp != D:
        x_p = jnp.pad(x_p, ((0, 0), (0, 0), (0, Dp - D)))

    # Additive padding bias (0 / -inf). O(B*S) precompute, negligible.
    bias = jnp.where(mask_p > 0, -jnp.inf, 0.0).astype(jnp.float32).reshape(B, 1, Sp)

    w_p = w.astype(jnp.float32)
    if (Dp, Hp) != (D, H):
        w_p = jnp.pad(w_p, ((0, Dp - D), (0, Hp - H)))
    d_p = d.astype(jnp.float32)
    if Hp != H:
        d_p = jnp.pad(d_p, (0, Hp - H))
    d2 = d_p.reshape(1, Hp)

    x_c = x_p.astype(compute_dtype)
    w_c = w_p.astype(compute_dtype)

    # Explicit scoped-VMEM budget: x/bias/W/d/out double buffers + proj scratch
    # + headroom for the (tq, Sp) scores/exp intermediates.
    cd = jnp.dtype(compute_dtype).itemsize
    need = (2 * Sp * Dp * cd          # x double buffer
            + 2 * Sp * 4              # bias double buffer
            + 2 * Dp * Hp * cd        # W double buffer
            + 2 * Hp * 4              # d
            + 2 * tq * Dp * 4         # output double buffer (f32)
            + Sp * Hp * cd            # proj scratch
            + 4 * tq * Sp * 4         # scores / exp / iota intermediates
            + 2 * tq * Hp * 4)        # q_proj temporaries
    vmem_limit = int(min(max(2 * need, 16 << 20), 64 << 20))

    grid = (B, Sp // tq)

    out = pl.pallas_call(
        self_att_kernel,
        out_shape=jax.ShapeDtypeStruct((B, Sp, Dp), jnp.float32),
        grid_spec=pltpu.PrefetchScalarGridSpec(
            num_scalar_prefetch=0,
            grid=grid,
            in_specs=[
                pl.BlockSpec((1, Sp, Dp), lambda b, q: (b, 0, 0)),  # x (keys/values)
                pl.BlockSpec((1, 1, Sp), lambda b, q: (b, 0, 0)),   # padding bias
                pl.BlockSpec((Dp, Hp), lambda b, q: (0, 0)),        # W    (grid-invariant)
                pl.BlockSpec((1, Hp), lambda b, q: (0, 0)),         # diag (grid-invariant)
            ],
            out_specs=pl.BlockSpec((1, tq, Dp), lambda b, q: (b, q, 0)),
            scratch_shapes=[pltpu.VMEM((Sp, Hp), compute_dtype)],
        ),
        compiler_params=pltpu.CompilerParams(
            dimension_semantics=("parallel", "arbitrary"),
            vmem_limit_bytes=vmem_limit,
        ),
    )(x_c, bias, w_c, d2)

    return out[:, :S, :D]


def reference(x, mask, w, d):
    proj = jax.nn.relu(jnp.einsum('bsd,dh->bsh', x, w))
    key = proj * d[None, None, :]
    scores = jnp.einsum('bqh,bkh->bqk', proj, key)
    S = x.shape[1]
    eye = jnp.eye(S, dtype=bool)[None]
    scores = jnp.where(eye, -jnp.inf, scores)
    scores = jnp.where((mask > 0)[:, None, :], -jnp.inf, scores)
    alpha = jax.nn.softmax(scores, axis=-1)
    return jnp.einsum('bqk,bkd->bqd', alpha, x)


if __name__ == "__main__":
    key = jax.random.PRNGKey(0)

    # --- test 1: tiny, exact-fit shapes --------------------------------------
    B, S, D = 2, 8, 32
    kx, kw, kd, k2 = jax.random.split(key, 4)
    x = jax.random.normal(kx, (B, S, D), dtype=jnp.float32)
    w = jax.random.normal(kw, (D, D), dtype=jnp.float32) * 0.05
    d = 1.0 + 0.1 * jax.random.normal(kd, (D,), dtype=jnp.float32)
    mask = jnp.zeros((B, S), dtype=jnp.int32).at[1, S - 2:].set(1)
    ref = reference(x, mask, w, d)

    # f32 compute path (tight check of kernel logic; approx reciprocal ~1e-3).
    out_f32 = jax.block_until_ready(self_att(x, mask, w, d, compute_dtype=jnp.float32))
    assert out_f32.shape == (B, S, D)
    assert jnp.allclose(out_f32, ref, atol=1e-2, rtol=1e-2), "f32 path mismatch"

    # Default bf16-MXU path (looser tolerance for bf16 operands).
    out_bf16 = jax.block_until_ready(self_att(x, mask, w, d))
    assert jnp.allclose(out_bf16, ref, atol=5e-2, rtol=5e-2), "bf16 path mismatch"

    # --- test 2: exercises seq / feature padding (S->104, D->128) ------------
    B2, S2, D2 = 2, 100, 48
    kx2, kw2, kd2 = jax.random.split(k2, 3)
    x2 = jax.random.normal(kx2, (B2, S2, D2), dtype=jnp.float32)
    w2 = jax.random.normal(kw2, (D2, D2), dtype=jnp.float32) * 0.05
    d2 = 1.0 + 0.1 * jax.random.normal(kd2, (D2,), dtype=jnp.float32)
    mask2 = jnp.zeros((B2, S2), dtype=jnp.int32).at[1, S2 - 7:].set(1)
    out2 = jax.block_until_ready(self_att(x2, mask2, w2, d2))
    ref2 = reference(x2, mask2, w2, d2)
    assert out2.shape == (B2, S2, D2)
    assert jnp.allclose(out2, ref2, atol=5e-2, rtol=5e-2), "padded-shape mismatch"

    print("KERNEL_OK")
</pallas_src>

<mosaic_0001>
module attributes {stable_mosaic.version = 11 : i64} {
  func.func @self_att_kernel(%arg0: i32, %arg1: i32, %arg2: memref<1x8x128xf32, #tpu.memory_space<vmem>>, %arg3: memref<1x1x8xf32, #tpu.memory_space<vmem>>, %arg4: memref<128x128xf32, #tpu.memory_space<vmem>>, %arg5: memref<1x128xf32, #tpu.memory_space<vmem>>, %arg6: memref<1x8x128xf32, #tpu.memory_space<vmem>>, %arg7: memref<8x128xf32, #tpu.memory_space<vmem>>) attributes {dimension_semantics = [#tpu.dimension_semantics<parallel>, #tpu.dimension_semantics<arbitrary>], iteration_bounds = array<i64: 2, 1>, scalar_prefetch = 0 : i64, scratch_operands = 1 : i64, tpu.core_type = #tpu.core_type<tc>, window_params = [{transform_indices = @transform_0, window_bounds = array<i64: 1, 8, 128>}, {transform_indices = @transform_1, window_bounds = array<i64: 1, 1, 8>}, {pipeline_mode = #tpu.pipeline_mode<synchronous>, transform_indices = @transform_2, window_bounds = array<i64: 128, 128>}, {pipeline_mode = #tpu.pipeline_mode<synchronous>, transform_indices = @transform_3, window_bounds = array<i64: 1, 128>}, {transform_indices = @transform_4, window_bounds = array<i64: 1, 8, 128>}]} {
    %c0 = arith.constant 0 : index
    %c0_0 = arith.constant 0 : index
    %c0_1 = arith.constant 0 : index
    %0 = vector.load %arg2[%c0, %c0_0, %c0_1] : memref<1x8x128xf32, #tpu.memory_space<vmem>>, vector<1x8x128xf32>
    %1 = vector.shape_cast %0 : vector<1x8x128xf32> to vector<8x128xf32>
    %c0_i32 = arith.constant 0 : i32
    %2 = arith.cmpi eq, %arg1, %c0_i32 : i32
    %3 = arith.extui %2 : i1 to i32
    %c0_i32_2 = arith.constant 0 : i32
    %4 = arith.cmpi ne, %3, %c0_i32_2 : i32
    scf.if %4 {
      %c0_18 = arith.constant 0 : index
      %c0_19 = arith.constant 0 : index
      %39 = vector.load %arg4[%c0_18, %c0_19] : memref<128x128xf32, #tpu.memory_space<vmem>>, vector<128x128xf32>
      %cst_20 = arith.constant dense<0.000000e+00> : vector<8x128xf32>
      %40 = tpu.matmul %1, %39, %cst_20 {dimension_numbers = #tpu.dot_dimension_numbers<[1], [0], [0], [1], [0, 0, 1, 1], [], []>} : vector<8x128xf32>, vector<128x128xf32>, vector<8x128xf32> -> vector<8x128xf32>
      %cst_21 = arith.constant 0.000000e+00 : f32
      %41 = vector.broadcast %cst_21 : f32 to vector<8x128xf32>
      %42 = arith.maximumf %40, %41 : vector<8x128xf32>
      %c0_22 = arith.constant 0 : index
      %c0_23 = arith.constant 0 : index
      %43 = vector.load %arg7[%c0_22, %c0_23] : memref<8x128xf32, #tpu.memory_space<vmem>>, vector<8x128xf32>
      tpu.vector_store %arg7[%c0_22, %c0_23], %42 {strides = array<i32>} : memref<8x128xf32, #tpu.memory_space<vmem>>, vector<8x128xf32>,
    } else {
    }
    %c8_i32 = arith.constant 8 : i32
    %5 = arith.muli %arg1, %c8_i32 : i32
    %6 = tpu.assume_multiple %5, 8 : i32
    %7 = arith.index_cast %6 : i32 to index
    %c0_3 = arith.constant 0 : index
    %8 = vector.load %arg7[%7, %c0_3] : memref<8x128xf32, #tpu.memory_space<vmem>>, vector<8x128xf32>
    %c0_4 = arith.constant 0 : index
    %c0_5 = arith.constant 0 : index
    %9 = vector.load %arg5[%c0_4, %c0_5] : memref<1x128xf32, #tpu.memory_space<vmem>>, vector<1x128xf32>
    %10 = vector.broadcast %9 : vector<1x128xf32> to vector<8x128xf32>
    %11 = arith.mulf %8, %10 : vector<8x128xf32>
    %c0_6 = arith.constant 0 : index
    %c0_7 = arith.constant 0 : index
    %12 = vector.load %arg7[%c0_6, %c0_7] : memref<8x128xf32, #tpu.memory_space<vmem>>, vector<8x128xf32>
    %cst = arith.constant dense<0.000000e+00> : vector<8x8xf32>
    %13 = tpu.matmul %11, %12, %cst {dimension_numbers = #tpu.dot_dimension_numbers<[1], [1], [0], [0], [0, 0, 1, 0], [], []>} : vector<8x128xf32>, vector<8x128xf32>, vector<8x8xf32> -> vector<8x8xf32>
    %c0_8 = arith.constant 0 : index
    %c0_9 = arith.constant 0 : index
    %c0_10 = arith.constant 0 : index
    %14 = vector.load %arg3[%c0_8, %c0_9, %c0_10] : memref<1x1x8xf32, #tpu.memory_space<vmem>>, vector<1x1x8xf32>
    %15 = vector.shape_cast %14 : vector<1x1x8xf32> to vector<1x8xf32>
    %16 = vector.broadcast %15 : vector<1x8xf32> to vector<8x8xf32>
    %17 = arith.addf %13, %16 : vector<8x8xf32>
    %18 = tpu.iota {dimensions = array<i32: 0>} : vector<8x8xi32>
    %19 = vector.broadcast %6 : i32 to vector<8x8xi32>
    %20 = arith.addi %18, %19 : vector<8x8xi32>
    %21 = tpu.iota {dimensions = array<i32: 1>} : vector<8x8xi32>
    %22 = arith.cmpi eq, %20, %21 : vector<8x8xi32>
    %cst_11 = arith.constant 0xFF800000 : f32
    %23 = vector.broadcast %cst_11 : f32 to vector<8x8xf32>
    %24 = arith.select %22, %23, %17 : vector<8x8xi1>, vector<8x8xf32>
    %cst_12 = arith.constant dense<0xFF800000> : vector<8xf32>
    %25 = vector.multi_reduction <maximumf>, %24, %cst_12 [1] : vector<8x8xf32> to vector<8xf32>
    %26 = vector.shape_cast %25 : vector<8xf32> to vector<8x1xf32>
    %27 = vector.broadcast %26 : vector<8x1xf32> to vector<8x8xf32>
    %28 = arith.subf %24, %27 : vector<8x8xf32>
    %29 = math.exp %28 : vector<8x8xf32>
    %cst_13 = arith.constant dense<0.000000e+00> : vector<8xf32>
    %30 = vector.multi_reduction <add>, %29, %cst_13 [1] : vector<8x8xf32> to vector<8xf32>
    %31 = vector.shape_cast %30 : vector<8xf32> to vector<8x1xf32>
    %cst_14 = arith.constant dense<0.000000e+00> : vector<8x128xf32>
    %32 = tpu.matmul %29, %1, %cst_14 {dimension_numbers = #tpu.dot_dimension_numbers<[1], [0], [0], [1], [0, 0, 1, 1], [], []>} : vector<8x8xf32>, vector<8x128xf32>, vector<8x128xf32> -> vector<8x128xf32>
    %33 = tpu.reciprocal %31 {approx = true} : vector<8x1xf32> -> vector<8x1xf32>
    %34 = vector.broadcast %33 : vector<8x1xf32> to vector<8x128xf32>
    %35 = arith.mulf %32, %34 : vector<8x128xf32>
    %c0_15 = arith.constant 0 : index
    %c0_16 = arith.constant 0 : index
    %c0_17 = arith.constant 0 : index
    %36 = vector.load %arg6[%c0_15, %c0_16, %c0_17] : memref<1x8x128xf32, #tpu.memory_space<vmem>>, vector<1x8x128xf32>
    %37 = vector.shape_cast %36 : vector<1x8x128xf32> to vector<8x128xf32>
    %38 = vector.shape_cast %35 : vector<8x128xf32> to vector<1x8x128xf32>
    tpu.vector_store %arg6[%c0_15, %c0_16, %c0_17], %38 {strides = array<i32>} : memref<1x8x128xf32, #tpu.memory_space<vmem>>, vector<1x8x128xf32>,
    return
  }
  func.func @transform_0(%arg0: i32, %arg1: i32) -> (i32, i32, i32) {
    %c0_i32 = arith.constant 0 : i32
    %c0_i32_0 = arith.constant 0 : i32
    %c0_i32_1 = arith.constant 0 : i32
    return %arg0, %c0_i32, %c0_i32_0 : i32, i32, i32
  }
  func.func @transform_1(%arg0: i32, %arg1: i32) -> (i32, i32, i32) {
    %c0_i32 = arith.constant 0 : i32
    %c0_i32_0 = arith.constant 0 : i32
    %c0_i32_1 = arith.constant 0 : i32
    return %arg0, %c0_i32, %c0_i32_0 : i32, i32, i32
  }
  func.func @transform_2(%arg0: i32, %arg1: i32) -> (i32, i32) {
    %c0_i32 = arith.constant 0 : i32
    %c0_i32_0 = arith.constant 0 : i32
    %c0_i32_1 = arith.constant 0 : i32
    return %c0_i32, %c0_i32_0 : i32, i32
  }
  func.func @transform_3(%arg0: i32, %arg1: i32) -> (i32, i32) {
    %c0_i32 = arith.constant 0 : i32
    %c0_i32_0 = arith.constant 0 : i32
    %c0_i32_1 = arith.constant 0 : i32
    return %c0_i32, %c0_i32_0 : i32, i32
  }
  func.func @transform_4(%arg0: i32, %arg1: i32) -> (i32, i32, i32) {
    %c0_i32 = arith.constant 0 : i32
    %c0_i32_0 = arith.constant 0 : i32
    return %arg0, %arg1, %c0_i32 : i32, i32, i32
  }
}

</mosaic_0001>

<llo_original>
// kernel: tpu_custom_call.1
$region0: #{tpu_custom_call.1}
  #allocation0 [shape = 'u32[]', space=smem, size = 0x4, offset = 0x4, fixed_abs, tag = 'smem constant byte address 0x4 - core index']
  #allocation1 [shape = 'u32[144,128]{1,0:T(1,128)}', space=vmem, size = 0x12000, scoped, tag = 'internal scratch']
  #allocation2 [shape = 'f32[8,128]{1,0:T(8,128)}', space=vmem, size = 0x1000, scoped, tag = 'scratch operand']
  %s0 = inlined_call_operand.hbm [shape: f32[2,8,128], index: 0, kind: input, shape index: {}]
  %s1 = inlined_call_operand.vmem [shape: f32[2,1,8], index: 1, kind: input, shape index: {}]
  %s2 = inlined_call_operand.hbm [shape: f32[128,128], index: 2, kind: input, shape index: {}]
  %s3 = inlined_call_operand.vmem [shape: f32[1,128], index: 3, kind: input, shape index: {}]
  %s4 = inlined_call_operand.hbm [shape: f32[2,8,128], index: 4, kind: output, shape index: {}]
  %s5 = sld [smem:[#allocation0]]
  $region61: #{tpu_custom_call.1} parent=0
    _
  %s7 = ssub.s32 1, %s5
  %s8 = scalar_select 0, %s7, %s5
  $region1: #{tpu_custom_call.1} parent=0
    #allocation3 [shape = 'u8[8192]{0}', space=vmem, size = 0x2000, scoped, tag = 'input window, operand 0']
    #allocation4 [shape = 's32[2]{0}', space=sflag, size = 0x8, scoped, tag = 'scoped memory for tpu_custom_call.1']
    #allocation5 [shape = 's32[2]{0}', space=sflag, size = 0x8, scoped, tag = 'scoped memory for tpu_custom_call.1']
    #allocation6 [shape = 'u8[65536]{0}', space=vmem, size = 0x10000, scoped, tag = 'input window, operand 2, single buffered']
    #allocation7 [shape = 's32[1]{0}', space=sflag, size = 0x4, scoped, tag = 'scoped memory for tpu_custom_call.1']
    #allocation8 [shape = 'u8[8192]{0}', space=vmem, size = 0x2000, scoped, tag = 'output window, operand 0']
    %9 = vsyncpa [#allocation4], 0
    %s10 = scalar_lea.sflag [#allocation4], 1
    %11 = vsyncpa %s10, 0
    %12 = vsyncpa [#allocation7], 0
    %13 = vsyncpa [#allocation5], 0
    %s14 = scalar_lea.sflag [#allocation5], 1
    %15 = vsyncpa %s14, 0
    loop: start=0, step=1, limit=4
    $region2: #{tpu_custom_call.1} parent=1 // loop_pre_header
      _
    $region3: #{tpu_custom_call.1} parent=1 // loop_header
      %s17 = sphi 0, %s21
      %p18 = scmp.ge.s32.totalorder %s17, 4
      %s24 = sphi 0, %s36
      %s25 = sphi 0, %s32
      %s26 = sphi 0, %s24
      %s27 = sphi 0, %s25
      %s28 = sphi 0, %s26
      %s29 = sphi 0, %s27
      %s39 = sphi 0, %s41
      %s42 = sphi 0, %s39
      %s43 = sphi 0, %s42
      %s59 = sphi 0, %s43
      %s65 = sphi 0, %s67
      %s68 = sphi 0, %s65
      %s69 = sphi 0, %s68
      %s85 = sphi 0, %s69
      %s89 = sphi 0, %s89
      %s91 = sphi 0, %s89
      %s92 = sphi 0, %s91
      %s106 = sphi 0, %s92
      %s110 = sphi 0, %s110
      %s112 = sphi 0, %s110
      %s113 = sphi 0, %s112
      %s127 = sphi 0, %s113
      %s135 = sphi 0, %s137
      %s138 = sphi 0, %s135
      %s139 = sphi 0, %s138
      %s155 = sphi 0, %s139
    $region4: #{tpu_custom_call.1} parent=1 // loop_header_branch
      %20 = sbr.rel (%p18) target = $region8
    $region5: #{tpu_custom_call.1} parent=1 // loop_body
      %s22 = ssub.s32 %s17, 1
      %s23 = ssub.s32 %s17, 2
      %s30 = sadd.s32 1, %s25
      %p31 = scmp.ge.s32.totalorder %s30, 1
      %s32 = scalar_select %p31, 0, %s30
      %s33 = sadd.s32 1, %s24
      %s34 = scalar_select %p31, %s33, %s24
      %p35 = scmp.ge.s32.totalorder %s34, 2
      %s36 = scalar_select %p35, 0, %s34
      %s37 = ssub.s32 %s24, %s36
      %p38 = scmp.eq.s32.totalorder %s37, 0
      %s40 = sadd.s32 %s39, 1
      %s41 = scalar_select %p38, %s39, %s40
      %p44 = pneg %p38
      %p45 = scmp.eq.s32.totalorder %s17, 1
      %p46 = por %p44, %p45
      %p47 = scmp.ne.s32.totalorder %s39, %s42
      %p48 = scmp.eq.s32.totalorder %s17, 0
      %p49 = por %p47, %p48
      %p50 = scmp.ne.s32.totalorder %s39, %s42
      %p51 = scmp.eq.s32.totalorder %s22, 1
      %p52 = por %p50, %p51
      %p53 = scmp.ne.s32.totalorder %s42, %s43
      %p54 = scmp.eq.s32.totalorder %s22, 0
      %p55 = por %p53, %p54
      %p56 = scmp.ne.s32.totalorder %s42, %s43
      %p57 = scmp.eq.s32.totalorder %s23, 1
      %p58 = por %p56, %p57
      %p60 = scmp.ne.s32.totalorder %s43, %s59
      %p61 = scmp.eq.s32.totalorder %s23, 0
      %p62 = por %p60, %p61
      %s63 = ssub.s32 %s24, %s36
      %p64 = scmp.eq.s32.totalorder %s63, 0
      %s66 = sadd.s32 %s65, 1
      %s67 = scalar_select %p64, %s65, %s66
      %p70 = pneg %p64
      %p71 = scmp.eq.s32.totalorder %s17, 1
      %p72 = por %p70, %p71
      %p73 = scmp.ne.s32.totalorder %s65, %s68
      %p74 = scmp.eq.s32.totalorder %s17, 0
      %p75 = por %p73, %p74
      %p76 = scmp.ne.s32.totalorder %s65, %s68
      %p77 = scmp.eq.s32.totalorder %s22, 1
      %p78 = por %p76, %p77
      %p79 = scmp.ne.s32.totalorder %s68, %s69
      %p80 = scmp.eq.s32.totalorder %s22, 0
      %p81 = por %p79, %p80
      %p82 = scmp.ne.s32.totalorder %s68, %s69
      %p83 = scmp.eq.s32.totalorder %s23, 1
      %p84 = por %p82, %p83
      %p86 = scmp.ne.s32.totalorder %s69, %s85
      %p87 = scmp.eq.s32.totalorder %s23, 0
      %p88 = por %p86, %p87
      %s90 = sadd.s32 %s89, 1
      %p93 = scmp.eq.s32.totalorder %s17, 1
      %p94 = scmp.ne.s32.totalorder %s89, %s91
      %p95 = scmp.eq.s32.totalorder %s17, 0
      %p96 = por %p94, %p95
      %p97 = scmp.ne.s32.totalorder %s89, %s91
      %p98 = scmp.eq.s32.totalorder %s22, 1
      %p99 = por %p97, %p98
      %p100 = scmp.ne.s32.totalorder %s91, %s92
      %p101 = scmp.eq.s32.totalorder %s22, 0
      %p102 = por %p100, %p101
      %p103 = scmp.ne.s32.totalorder %s91, %s92
      %p104 = scmp.eq.s32.totalorder %s23, 1
      %p105 = por %p103, %p104
      %p107 = scmp.ne.s32.totalorder %s92, %s106
      %p108 = scmp.eq.s32.totalorder %s23, 0
      %p109 = por %p107, %p108
      %s111 = sadd.s32 %s110, 1
      %p114 = scmp.eq.s32.totalorder %s17, 1
      %p115 = scmp.ne.s32.totalorder %s110, %s112
      %p116 = scmp.eq.s32.totalorder %s17, 0
      %p117 = por %p115, %p116
      %p118 = scmp.ne.s32.totalorder %s110, %s112
      %p119 = scmp.eq.s32.totalorder %s22, 1
      %p120 = por %p118, %p119
      %p121 = scmp.ne.s32.totalorder %s112, %s113
      %p122 = scmp.eq.s32.totalorder %s22, 0
      %p123 = por %p121, %p122
      %p124 = scmp.ne.s32.totalorder %s112, %s113
      %p125 = scmp.eq.s32.totalorder %s23, 1
      %p126 = por %p124, %p125
      %p128 = scmp.ne.s32.totalorder %s113, %s127
      %p129 = scmp.eq.s32.totalorder %s23, 0
      %p130 = por %p128, %p129
      %s131 = ssub.s32 %s24, %s36
      %s132 = ssub.s32 %s25, %s32
      %s133 = sor.u32 %s131, %s132
      %p134 = scmp.eq.s32.totalorder %s133, 0
      %s136 = sadd.s32 %s135, 1
      %s137 = scalar_select %p134, %s135, %s136
      %p140 = pneg %p134
      %p141 = scmp.eq.s32.totalorder %s17, 1
      %p142 = por %p140, %p141
      %p143 = scmp.ne.s32.totalorder %s135, %s138
      %p144 = scmp.eq.s32.totalorder %s17, 0
      %p145 = por %p143, %p144
      %p146 = scmp.ne.s32.totalorder %s135, %s138
      %p147 = scmp.eq.s32.totalorder %s22, 1
      %p148 = por %p146, %p147
      %p149 = scmp.ne.s32.totalorder %s138, %s139
      %p150 = scmp.eq.s32.totalorder %s22, 0
      %p151 = por %p149, %p150
      %p152 = scmp.ne.s32.totalorder %s138, %s139
      %p153 = scmp.eq.s32.totalorder %s23, 1
      %p154 = por %p152, %p153
      %p156 = scmp.ne.s32.totalorder %s139, %s155
      %p157 = scmp.eq.s32.totalorder %s23, 0
      %p158 = por %p156, %p157
      %p159 = scmp.le.s32.totalorder 1, %s17
      %p160 = scmp.lt.s32.totalorder %s17, 3
      %p161 = pnand %p159, %p160
      %p162 = pneg %p161
      // Predicated region
      $region9: #{tpu_custom_call.1} parent=5 // pred_check
        _
      $region10: #{tpu_custom_call.1} parent=5 // pred_check_branch
        %164 = sbr.rel (%p161) target = $region12
      $region11: #{tpu_custom_call.1} parent=5 // pred_region
        %s165 = ssub.s32 %s17, 1
        // Predicated region
        $region13: #{tpu_custom_call.1} parent=11 // pred_check
          %p166 = pneg %p102
        $region14: #{tpu_custom_call.1} parent=11 // pred_check_branch
          %168 = sbr.rel (%p166) target = $region16
        $region15: #{tpu_custom_call.1} parent=11 // pred_region
          %s170 = ssub.s32 2048, 2048
          %171 = vsyncadd [#allocation7], %s170
          %s172 = sshll.u32 [#allocation6], 4
          %s173 = int_to_ptr.vmem [resolvable:$true] %s172
          %178 = dma.hbm_to_vmem [thread:$0]  %s2, 2048, %s173, [#allocation7], 128, 128, 8
        $region16: #{tpu_custom_call.1} parent=11 // pred_fallthru
          _
        // Predicated region
        $region17: #{tpu_custom_call.1} parent=11 // pred_check
          %p179 = pneg %p123
        $region18: #{tpu_custom_call.1} parent=11 // pred_check_branch
          %181 = sbr.rel (%p179) target = $region20
        $region19: #{tpu_custom_call.1} parent=11 // pred_region
          _
        $region20: #{tpu_custom_call.1} parent=11 // pred_fallthru
          _
      $region12: #{tpu_custom_call.1} parent=5 // pred_fallthru
        _
      %p182 = scmp.lt.s32.totalorder %s17, 2
      // Predicated region
      $region21: #{tpu_custom_call.1} parent=5 // pred_check
        %p183 = pneg %p182
      $region22: #{tpu_custom_call.1} parent=5 // pred_check_branch
        %185 = sbr.rel (%p183) target = $region24
      $region23: #{tpu_custom_call.1} parent=5 // pred_region
        // Predicated region
        $region25: #{tpu_custom_call.1} parent=23 // pred_check
          %p186 = pneg %p49
        $region26: #{tpu_custom_call.1} parent=23 // pred_check_branch
          %188 = sbr.rel (%p186) target = $region28
        $region27: #{tpu_custom_call.1} parent=23 // pred_region
          %s189 = sand.u32 %s39, 1
          %s190 = scalar_lea.sflag [#allocation4], %s189
          %s191 = sand.u32 %s39, 1
          %s192 = smul.addr %s191, 8
          %s193 = scalar_lea.vmem [#allocation3], %s192
          %s195 = ssub.s32 128, 128
          %196 = vsyncadd %s190, %s195
          %s197 = smul.addr %s24, 128
          %s198 = scalar_lea.hbm %s0, %s197
          %s200 = sshll.u32 %s193, 4
          %s201 = int_to_ptr.vmem [resolvable:$true] %s200
          %203 = dma.hbm_to_vmem [thread:$0]  %s198, 128, %s201, %s190
        $region28: #{tpu_custom_call.1} parent=23 // pred_fallthru
          _
        // Predicated region
        $region29: #{tpu_custom_call.1} parent=23 // pred_check
          %p204 = pneg %p75
        $region30: #{tpu_custom_call.1} parent=23 // pred_check_branch
          %206 = sbr.rel (%p204) target = $region32
        $region31: #{tpu_custom_call.1} parent=23 // pred_region
          %p207 = scmp.lt.s32.totalorder %s24, 1
          %s208 = scalar_select %p207, %s24, 1
          %s209 = scalar_lea.vmem %s1, %s208
        $region32: #{tpu_custom_call.1} parent=23 // pred_fallthru
          _
      $region24: #{tpu_custom_call.1} parent=5 // pred_fallthru
        _
      %p210 = scmp.le.s32.totalorder 1, %s17
      %p211 = scmp.lt.s32.totalorder %s17, 3
      %p212 = pnand %p210, %p211
      %p213 = pneg %p212
      // Predicated region
      $region33: #{tpu_custom_call.1} parent=5 // pred_check
        _
      $region34: #{tpu_custom_call.1} parent=5 // pred_check_branch
        %215 = sbr.rel (%p212) target = $region36
      $region35: #{tpu_custom_call.1} parent=5 // pred_region
        %s216 = ssub.s32 %s17, 1
        %s217 = sand.u32 %s42, 1
        %s218 = scalar_lea.sflag [#allocation4], %s217
        %s219 = sand.u32 %s42, 1
        %s220 = smul.addr %s219, 8
        %s221 = scalar_lea.vmem [#allocation3], %s220
        // Predicated region
        $region37: #{tpu_custom_call.1} parent=35 // pred_check
          %p222 = pneg %p55
        $region38: #{tpu_custom_call.1} parent=35 // pred_check_branch
          %224 = sbr.rel (%p222) target = $region40
        $region39: #{tpu_custom_call.1} parent=35 // pred_region
          %225 = dma.done %s218, 128
        $region40: #{tpu_custom_call.1} parent=35 // pred_fallthru
          _
        // Predicated region
        $region41: #{tpu_custom_call.1} parent=35 // pred_check
          %p226 = pneg %p102
        $region42: #{tpu_custom_call.1} parent=35 // pred_check_branch
          %228 = sbr.rel (%p226) target = $region44
        $region43: #{tpu_custom_call.1} parent=35 // pred_region
          %229 = dma.done [#allocation7], 2048
        $region44: #{tpu_custom_call.1} parent=35 // pred_fallthru
          _
        %s230 = sand.u32 %s42, 1
        %s231 = scalar_lea.sflag [#allocation4], %s230
        %s232 = sand.u32 %s42, 1
        %s233 = smul.addr %s232, 8
        %s234 = scalar_lea.vmem [#allocation3], %s233
        %p235 = pneg %p55
        %p236 = pneg %p52
        %p237 = scmp.lt.s32.totalorder %s26, 1
        %s238 = scalar_select %p237, %s26, 1
        %s239 = scalar_lea.vmem %s1, %s238
        %p240 = pneg %p81
        %p241 = pneg %p78
        %p242 = pneg %p102
        %p243 = pneg %p99
        %p244 = pneg %p123
        %p245 = pneg %p120
        %p246 = pneg %p151
        %p247 = pneg %p148
        %s248 = sand.u32 %s138, 1
        %s249 = scalar_lea.sflag [#allocation5], %s248
        %s250 = sand.u32 %s138, 1
        %s251 = smul.addr %s250, 8
        %s252 = scalar_lea.vmem [#allocation8], %s251
        %p253 = scmp.lt.s32.totalorder %s26, 1
        %s254 = scalar_select %p253, %s26, 1
        %s255 = scalar_lea.vmem %s1, %s254
        %v256 = vld [vmem:[%s221] sm:$0xff]
        %p257 = scmp.eq.s32.totalorder %s27, 0
        // Predicated region
        $region45: #{tpu_custom_call.1} parent=35 // pred_check
          %p258 = pneg %p257
        $region46: #{tpu_custom_call.1} parent=35 // pred_check_branch
          %260 = sbr.rel (%p258) target = $region48
        $region47: #{tpu_custom_call.1} parent=35 // pred_region
          %v261 = vld [vmem:[#allocation6] sm:$0xff]
          %v262 = vld [vmem:[#allocation6 + $0x8] sm:$0xff]
          %v263 = vld [vmem:[#allocation6 + $0x10] sm:$0xff]
          %v264 = vld [vmem:[#allocation6 + $0x18] sm:$0xff]
          %v265 = vld [vmem:[#allocation6 + $0x20] sm:$0xff]
          %v266 = vld [vmem:[#allocation6 + $0x28] sm:$0xff]
          %v267 = vld [vmem:[#allocation6 + $0x30] sm:$0xff]
          %v268 = vld [vmem:[#allocation6 + $0x38] sm:$0xff]
          %v269 = vld [vmem:[#allocation6 + $0x40] sm:$0xff]
          %v270 = vld [vmem:[#allocation6 + $0x48] sm:$0xff]
          %v271 = vld [vmem:[#allocation6 + $0x50] sm:$0xff]
          %v272 = vld [vmem:[#allocation6 + $0x58] sm:$0xff]
          %v273 = vld [vmem:[#allocation6 + $0x60] sm:$0xff]
          %v274 = vld [vmem:[#allocation6 + $0x68] sm:$0xff]
          %v275 = vld [vmem:[#allocation6 + $0x70] sm:$0xff]
          %v276 = vld [vmem:[#allocation6 + $0x78] sm:$0xff]
          %277 = vmatprep.subr.mxu0 0.0
          %278 = vmatpush1.msra.mxu0 %v261
          %279 = vmatprep.subr.mxu0 0.0
          %280 = vmatpush1.msra.mxu0 %v262
          %281 = vmatprep.subr.mxu0 0.0
          %282 = vmatpush1.msra.mxu0 %v263
          %283 = vmatprep.subr.mxu0 0.0
          %284 = vmatpush1.msra.mxu0 %v264
          %285 = vmatprep.subr.mxu0 0.0
          %286 = vmatpush1.msra.mxu0 %v265
          %287 = vmatprep.subr.mxu0 0.0
          %288 = vmatpush1.msra.mxu0 %v266
          %289 = vmatprep.subr.mxu0 0.0
          %290 = vmatpush1.msra.mxu0 %v267
          %291 = vmatprep.subr.mxu0 0.0
          %292 = vmatpush1.msra.mxu0 %v268
          %293 = vmatprep.subr.mxu0 0.0
          %294 = vmatpush1.msra.mxu0 %v269
          %295 = vmatprep.subr.mxu0 0.0
          %296 = vmatpush1.msra.mxu0 %v270
          %297 = vmatprep.subr.mxu0 0.0
          %298 = vmatpush1.msra.mxu0 %v271
          %299 = vmatprep.subr.mxu0 0.0
          %300 = vmatpush1.msra.mxu0 %v272
          %301 = vmatprep.subr.mxu0 0.0
          %302 = vmatpush1.msra.mxu0 %v273
          %303 = vmatprep.subr.mxu0 0.0
          %304 = vmatpush1.msra.mxu0 %v274
          %305 = vmatprep.subr.mxu0 0.0
          %306 = vmatpush1.msra.mxu0 %v275
          %307 = vmatprep.subr.mxu0 0.0
          %308 = vmatpush1.msra.mxu0 %v276
          %309 = vmatprep.subr.mxu0 0.0
          %310 = vmatpush1.msra.mxu0 0.0
          %311 = vmatprep.subr.mxu0 0.0
          %312 = vmatpush1.msra.mxu0 0.0
          %313 = vmatprep.subr.mxu0 0.0
          %314 = vmatpush1.msra.mxu0 0.0
          %315 = vmatprep.subr.mxu0 0.0
          %316 = vmatpush1.msra.mxu0 0.0
          %317 = vmatprep.subr.mxu0 0.0
          %318 = vmatpush1.msra.mxu0 0.0
          %319 = vmatprep.subr.mxu0 0.0
          %320 = vmatpush1.msra.mxu0 0.0
          %321 = vmatprep.subr.mxu0 0.0
          %322 = vmatpush1.msra.mxu0 0.0
          %323 = vmatprep.subr.mxu0 0.0
          %324 = vmatpush1.msra.mxu0 0.0
          %325 = vmatprep.subr.mxu0 0.0
          %326 = vmatpush1.msra.mxu0 0.0
          %327 = vmatprep.subr.mxu0 0.0
          %328 = vmatpush1.msra.mxu0 0.0
          %329 = vmatprep.subr.mxu0 0.0
          %330 = vmatpush1.msra.mxu0 0.0
          %331 = vmatprep.subr.mxu0 0.0
          %332 = vmatpush1.msra.mxu0 0.0
          %333 = vmatprep.subr.mxu0 0.0
          %334 = vmatpush1.msra.mxu0 0.0
          %335 = vmatprep.subr.mxu0 0.0
          %336 = vmatpush1.msra.mxu0 0.0
          %337 = vmatprep.subr.mxu0 0.0
          %338 = vmatpush1.msra.mxu0 0.0
          %339 = vmatprep.subr.mxu0 0.0
          %340 = vmatpush1.msra.mxu0 0.0
          %341 = vmatprep.mubr.f32.mxu0 0.0
          %342 = vmatmul.mubr.f32.gmra.mrb[0].mxu0 %v256
          %v343 = vpop.f32.mrb[0].mxu0
          %v344 = vadd.f32 0.0, %v343
          %v345 = vpop.f32.mrb[0].mxu0
          %346 = vdwg.mxu0
          %v347 = vmax.f32 %v344, 0.0
          %348 = vst [vmem:[#allocation2] sm:$0xff] %v347
        $region48: #{tpu_custom_call.1} parent=35 // pred_fallthru
          _
        %s349 = smul.u32 %s27, 8
        %s350 = scalar_lea.vmem [#allocation2], %s349
        %v351 = vld [vmem:[%s350] sm:$0xff]
        %v352 = vld [vmem:[%s3] sm:$0x1]
        %v354 = vlaneseq
        %v355 = vshrl.u32 %v354, 7
        %v356 = vsub.s32 0, %v355
        %v357 = vrot.slane %v352, %v356
        %v359 = vmul.f32 %v351, %v357
        %v360 = vld [vmem:[#allocation2] sm:$0xff]
        %v361 = vld [vmem:[%s255] sm:$0x1]
        %v363 = vlaneseq
        %v364 = vshrl.u32 %v363, 7
        %v365 = vsub.s32 0, %v364
        %v366 = vrot.slane %v361, %v365
        %368 = vmatprep.subr.mxu0 0.0
        %369 = vmatpush1.xpose.msra.mxu0 %v360
        %370 = vmatprep.subr.mxu0 0.0
        %371 = vmatpush1.xpose.msra.mxu0 0.0
        %372 = vmatprep.subr.mxu0 0.0
        %373 = vmatpush1.xpose.msra.mxu0 0.0
        %374 = vmatprep.subr.mxu0 0.0
        %375 = vmatpush1.xpose.msra.mxu0 0.0
        %376 = vmatprep.subr.mxu0 0.0
        %377 = vmatpush1.xpose.msra.mxu0 0.0
        %378 = vmatprep.subr.mxu0 0.0
        %379 = vmatpush1.xpose.msra.mxu0 0.0
        %380 = vmatprep.subr.mxu0 0.0
        %381 = vmatpush1.xpose.msra.mxu0 0.0
        %382 = vmatprep.subr.mxu0 0.0
        %383 = vmatpush1.xpose.msra.mxu0 0.0
        %384 = vmatprep.subr.mxu0 0.0
        %385 = vmatpush1.xpose.msra.mxu0 0.0
        %386 = vmatprep.subr.mxu0 0.0
        %387 = vmatpush1.xpose.msra.mxu0 0.0
        %388 = vmatprep.subr.mxu0 0.0
        %389 = vmatpush1.xpose.msra.mxu0 0.0
        %390 = vmatprep.subr.mxu0 0.0
        %391 = vmatpush1.xpose.msra.mxu0 0.0
        %392 = vmatprep.subr.mxu0 0.0
        %393 = vmatpush1.xpose.msra.mxu0 0.0
        %394 = vmatprep.subr.mxu0 0.0
        %395 = vmatpush1.xpose.msra.mxu0 0.0
        %396 = vmatprep.subr.mxu0 0.0
        %397 = vmatpush1.xpose.msra.mxu0 0.0
        %398 = vmatprep.subr.mxu0 0.0
        %399 = vmatpush1.xpose.msra.mxu0 0.0
        %400 = vmatprep.subr.mxu0 0.0
        %401 = vmatpush1.xpose.msra.mxu0 0.0
        %402 = vmatprep.subr.mxu0 0.0
        %403 = vmatpush1.xpose.msra.mxu0 0.0
        %404 = vmatprep.subr.mxu0 0.0
        %405 = vmatpush1.xpose.msra.mxu0 0.0
        %406 = vmatprep.subr.mxu0 0.0
        %407 = vmatpush1.xpose.msra.mxu0 0.0
        %408 = vmatprep.subr.mxu0 0.0
        %409 = vmatpush1.xpose.msra.mxu0 0.0
        %410 = vmatprep.subr.mxu0 0.0
        %411 = vmatpush1.xpose.msra.mxu0 0.0
        %412 = vmatprep.subr.mxu0 0.0
        %413 = vmatpush1.xpose.msra.mxu0 0.0
        %414 = vmatprep.subr.mxu0 0.0
        %415 = vmatpush1.xpose.msra.mxu0 0.0
        %416 = vmatprep.subr.mxu0 0.0
        %417 = vmatpush1.xpose.msra.mxu0 0.0
        %418 = vmatprep.subr.mxu0 0.0
        %419 = vmatpush1.xpose.msra.mxu0 0.0
        %420 = vmatprep.subr.mxu0 0.0
        %421 = vmatpush1.xpose.msra.mxu0 0.0
        %422 = vmatprep.subr.mxu0 0.0
        %423 = vmatpush1.xpose.msra.mxu0 0.0
        %424 = vmatprep.subr.mxu0 0.0
        %425 = vmatpush1.xpose.msra.mxu0 0.0
        %426 = vmatprep.subr.mxu0 0.0
        %427 = vmatpush1.xpose.msra.mxu0 0.0
        %428 = vmatprep.subr.mxu0 0.0
        %429 = vmatpush1.xpose.msra.mxu0 0.0
        %430 = vmatprep.subr.mxu0 0.0
        %431 = vmatpush1.xpose.msra.mxu0 0.0
        %432 = vmatprep.mubr.f32.mxu0 0.0
        %433 = vmatmul.mubr.f32.gmra.mrb[0].mxu0 %v359
        %v434 = vpop.f32.mrb[0].mxu0
        %v435 = vadd.f32 %v366, %v434
        %v436 = vpop.f32.mrb[0].mxu0
        %437 = vdwg.mxu0
        %v438 = vlaneseq
        %v439 = vshrl.u32 %v438, 7
        %v440 = vstv %s349
        %v441 = vadd.s32 %v439, %v440
        %v442 = vlaneseq
        %v443 = vand.u32 %v442, 127
        %vm444 = vcmp.eq.s32.totalorder %v441, %v443
        %v445 = vsel %vm444, -inf, %v435
        %vm446 = vcmask 64512
        %v447 = vsel %vm446, %v445, -inf
        %448 = vmax.xlane.f32.xlu0 %v447
        %v449 = vpop.xlane.xlu0 %448
        %v450 = vsub.f32 %v445, %v449
        %v451 = vmul.f32 %v450, 1.442695
        %v452 = vpow.pop %v451
        %v453 = vsel %vm446, %v452, 0.0
        %454 = vadd.xlane.f32.xlu0 %v453
        %v455 = vpop.xlane.xlu0 %454
        %v457 = vsel %vm446, %v452, 0
        %459 = vmatprep.subr.mxu0 0.0
        %460 = vmatpush1.msra.mxu0 %v256
        %461 = vmatprep.subr.mxu0 0.0
        %462 = vmatpush1.msra.mxu0 0.0
        %463 = vmatprep.subr.mxu0 0.0
        %464 = vmatpush1.msra.mxu0 0.0
        %465 = vmatprep.subr.mxu0 0.0
        %466 = vmatpush1.msra.mxu0 0.0
        %467 = vmatprep.subr.mxu0 0.0
        %468 = vmatpush1.msra.mxu0 0.0
        %469 = vmatprep.subr.mxu0 0.0
        %470 = vmatpush1.msra.mxu0 0.0
        %471 = vmatprep.subr.mxu0 0.0
        %472 = vmatpush1.msra.mxu0 0.0
        %473 = vmatprep.subr.mxu0 0.0
        %474 = vmatpush1.msra.mxu0 0.0
        %475 = vmatprep.subr.mxu0 0.0
        %476 = vmatpush1.msra.mxu0 0.0
        %477 = vmatprep.subr.mxu0 0.0
        %478 = vmatpush1.msra.mxu0 0.0
        %479 = vmatprep.subr.mxu0 0.0
        %480 = vmatpush1.msra.mxu0 0.0
        %481 = vmatprep.subr.mxu0 0.0
        %482 = vmatpush1.msra.mxu0 0.0
        %483 = vmatprep.subr.mxu0 0.0
        %484 = vmatpush1.msra.mxu0 0.0
        %485 = vmatprep.subr.mxu0 0.0
        %486 = vmatpush1.msra.mxu0 0.0
        %487 = vmatprep.subr.mxu0 0.0
        %488 = vmatpush1.msra.mxu0 0.0
        %489 = vmatprep.subr.mxu0 0.0
        %490 = vmatpush1.msra.mxu0 0.0
        %491 = vmatprep.subr.mxu0 0.0
        %492 = vmatpush1.msra.mxu0 0.0
        %493 = vmatprep.subr.mxu0 0.0
        %494 = vmatpush1.msra.mxu0 0.0
        %495 = vmatprep.subr.mxu0 0.0
        %496 = vmatpush1.msra.mxu0 0.0
        %497 = vmatprep.subr.mxu0 0.0
        %498 = vmatpush1.msra.mxu0 0.0
        %499 = vmatprep.subr.mxu0 0.0
        %500 = vmatpush1.msra.mxu0 0.0
        %501 = vmatprep.subr.mxu0 0.0
        %502 = vmatpush1.msra.mxu0 0.0
        %503 = vmatprep.subr.mxu0 0.0
        %504 = vmatpush1.msra.mxu0 0.0
        %505 = vmatprep.subr.mxu0 0.0
        %506 = vmatpush1.msra.mxu0 0.0
        %507 = vmatprep.subr.mxu0 0.0
        %508 = vmatpush1.msra.mxu0 0.0
        %509 = vmatprep.subr.mxu0 0.0
        %510 = vmatpush1.msra.mxu0 0.0
        %511 = vmatprep.subr.mxu0 0.0
        %512 = vmatpush1.msra.mxu0 0.0
        %513 = vmatprep.subr.mxu0 0.0
        %514 = vmatpush1.msra.mxu0 0.0
        %515 = vmatprep.subr.mxu0 0.0
        %516 = vmatpush1.msra.mxu0 0.0
        %517 = vmatprep.subr.mxu0 0.0
        %518 = vmatpush1.msra.mxu0 0.0
        %519 = vmatprep.subr.mxu0 0.0
        %520 = vmatpush1.msra.mxu0 0.0
        %521 = vmatprep.subr.mxu0 0.0
        %522 = vmatpush1.msra.mxu0 0.0
        %523 = vmatprep.mubr.f32.mxu0 0.0
        %524 = vmatmul.mubr.f32.gmra.mrb[0].mxu0 %v457
        %v525 = vpop.f32.mrb[0].mxu0
        %v526 = vadd.f32 0.0, %v525
        %v527 = vpop.f32.mrb[0].mxu0
        %528 = vdwg.mxu0
        %v529 = vrcp.pop %v455
        %v530 = vmul.f32 %v526, %v529
        %531 = vst [vmem:[%s252] sm:$0xff] %v530
        %s532 = sand.u32 %s138, 1
        %s533 = scalar_lea.sflag [#allocation5], %s532
        %s534 = sand.u32 %s138, 1
        %s535 = smul.addr %s534, 8
        %s536 = scalar_lea.vmem [#allocation8], %s535
        // Predicated region
        $region49: #{tpu_custom_call.1} parent=35 // pred_check
          %p537 = pneg %p148
        $region50: #{tpu_custom_call.1} parent=35 // pred_check_branch
          %539 = sbr.rel (%p537) target = $region52
        $region51: #{tpu_custom_call.1} parent=35 // pred_region
          %s541 = ssub.s32 128, 128
          %542 = vsyncadd %s533, %s541
          %s543 = sadd.s32 %s27, %s26
          %s544 = smul.addr %s543, 128
          %s545 = scalar_lea.hbm %s4, %s544
          %s547 = sshll.u32 %s536, 4
          %s548 = int_to_ptr.vmem [resolvable:$true] %s547
          %550 = dma.vmem_to_hbm [thread:$0]  %s548, 128, %s545, %s533
        $region52: #{tpu_custom_call.1} parent=35 // pred_fallthru
          _
      $region36: #{tpu_custom_call.1} parent=5 // pred_fallthru
        _
      %p551 = scmp.le.s32.totalorder 2, %s17
      // Predicated region
      $region53: #{tpu_custom_call.1} parent=5 // pred_check
        %p552 = pneg %p551
      $region54: #{tpu_custom_call.1} parent=5 // pred_check_branch
        %554 = sbr.rel (%p552) target = $region56
      $region55: #{tpu_custom_call.1} parent=5 // pred_region
        %s555 = ssub.s32 %s17, 2
        // Predicated region
        $region57: #{tpu_custom_call.1} parent=55 // pred_check
          %p556 = pneg %p154
        $region58: #{tpu_custom_call.1} parent=55 // pred_check_branch
          %558 = sbr.rel (%p556) target = $region60
        $region59: #{tpu_custom_call.1} parent=55 // pred_region
          %s559 = sand.u32 %s139, 1
          %s560 = scalar_lea.sflag [#allocation5], %s559
          %s561 = sand.u32 %s139, 1
          %s562 = smul.addr %s561, 8
          %s563 = scalar_lea.vmem [#allocation8], %s562
          %564 = dma.done %s560, 128
        $region60: #{tpu_custom_call.1} parent=55 // pred_fallthru
          _
      $region56: #{tpu_custom_call.1} parent=5 // pred_fallthru
        _
    $region6: #{tpu_custom_call.1} parent=1 // loop_footer
      %s21 = sadd.s32 1, %s17
    $region7: #{tpu_custom_call.1} parent=1 // loop_footer_branch
      %16 = sbr.rel target = $region3
    $region8: #{tpu_custom_call.1} parent=1 // loop_exit
      _
    %565 = vsyncpa [#allocation4], 1
    %s566 = scalar_lea.sflag [#allocation4], 1
    %567 = vsyncpa %s566, 1
    %568 = vsyncpa [#allocation7], 1
    %569 = vsyncpa [#allocation5], 1
    %s570 = scalar_lea.sflag [#allocation5], 1
    %571 = vsyncpa %s570, 1

</llo_original>
